<compile_context>
chip_gen: v6e
topology: v6e:2x2x1
jax: 0.10.0
libtpu: 0.0.40
codegen_flags: <defaults>
</compile_context>

<pallas_src>
import functools

import jax
import jax.numpy as jnp
from jax.experimental import pallas as pl
from jax.experimental.pallas import tpu as pltpu


def _sigmoid(x):
    # sigmoid(x) = 0.5 * (tanh(x/2) + 1): runs on the EUP, no divide on the
    # recurrence critical path.
    return 0.5 * (jnp.tanh(0.5 * x) + 1.0)


# --------------------------------------------------------------------------
# Kernel 1: hoisted input projection  gates_x = emb @ W_ih_e + b_lstm
# --------------------------------------------------------------------------
def _input_proj_kernel(emb_ref, w_ref, b_ref, out_ref):
    out_ref[...] = (
        jnp.dot(emb_ref[...], w_ref[...], preferred_element_type=jnp.float32)
        + b_ref[...]
    )


# --------------------------------------------------------------------------
# Kernel 2: sequential recurrence (attention + LSTM cell), fori_loop over t.
# --------------------------------------------------------------------------
def _decoder_recurrence_kernel(enc_ref, mask_ref, gx_ref, w_ih_c_ref, w_hh_ref,
                               h_out_ref, ctx_out_ref, att_out_ref):
    L, B, _ = gx_ref.shape
    _, T_enc, H = enc_ref.shape

    def step(t, carry):
        h, c = carry                                   # (B, H) f32 each
        enc = enc_ref[...]                             # (B, T_enc, H) bf16
        mask = mask_ref[...]                           # (B, 1, T_enc) f32

        # ---- attention (MXU): query = previous decoder state ----
        q = h.astype(jnp.bfloat16).reshape(B, 1, H)
        scores = jnp.einsum('bqh,bth->bqt', q, enc,
                            preferred_element_type=jnp.float32)   # (B,1,T)
        scores = jnp.where(mask > 0.0, scores, -1e30)
        scores = scores - jnp.max(scores, axis=-1, keepdims=True)
        e = jnp.exp(scores)
        denom = jnp.sum(e, axis=-1, keepdims=True)
        att = e * pl.reciprocal(denom, approx=True)               # (B,1,T)
        ctx = jnp.einsum('bqt,bth->bqh', att.astype(jnp.bfloat16), enc,
                         preferred_element_type=jnp.float32)      # (B,1,H)
        ctx = ctx.reshape(B, H)

        # ---- LSTM cell (PyTorch gate order i, f, g, o) ----
        gates = (gx_ref[t]                                         # (B, 4H)
                 + jnp.dot(ctx.astype(jnp.bfloat16), w_ih_c_ref[...],
                           preferred_element_type=jnp.float32)
                 + jnp.dot(h.astype(jnp.bfloat16), w_hh_ref[...],
                           preferred_element_type=jnp.float32))
        i_g = _sigmoid(gates[:, 0:H])
        f_g = _sigmoid(gates[:, H:2 * H])
        g_g = jnp.tanh(gates[:, 2 * H:3 * H])
        o_g = _sigmoid(gates[:, 3 * H:4 * H])
        c_new = f_g * c + i_g * g_g
        h_new = o_g * jnp.tanh(c_new)

        # ---- store per-step results (classifier deferred to kernel 3) ----
        h_out_ref[t] = h_new.astype(h_out_ref.dtype)
        ctx_out_ref[t] = ctx.astype(ctx_out_ref.dtype)
        att_out_ref[t] = att.reshape(B, T_enc)
        return (h_new, c_new)

    h0 = jnp.zeros((B, H), jnp.float32)
    c0 = jnp.zeros((B, H), jnp.float32)
    jax.lax.fori_loop(0, L, step, (h0, c0))


# --------------------------------------------------------------------------
# Kernel 3: fused classifier + label-smoothed CE (ignore_index=-1, mean).
#           Tiled over L (reduction grid); logits stay in VMEM.
# --------------------------------------------------------------------------
def _cls_loss_kernel(h_ref, ctx_ref, lbl_ref, w_h_ref, w_c_ref, b_ref,
                     loss_ref, sum_scr, cnt_scr, *, smoothing):
    i = pl.program_id(0)

    @pl.when(i == 0)
    def _():
        sum_scr[...] = jnp.zeros_like(sum_scr)
        cnt_scr[...] = jnp.zeros_like(cnt_scr)

    tl, b, hdim = h_ref.shape
    n = tl * b

    hb = h_ref[...].reshape(n, hdim)                    # bf16
    cb = ctx_ref[...].reshape(n, hdim)                  # bf16
    logits = (jnp.dot(hb, w_h_ref[...], preferred_element_type=jnp.float32)
              + jnp.dot(cb, w_c_ref[...], preferred_element_type=jnp.float32)
              + b_ref[...])                             # (n, V) f32
    V = logits.shape[-1]
    logits = logits.reshape(tl, b, V)
    labels = lbl_ref[...]                               # (tl, b) int32

    m = jnp.max(logits, axis=-1, keepdims=True)
    z = logits - m
    lse = jnp.log(jnp.sum(jnp.exp(z), axis=-1, keepdims=True))
    logp = z - lse                                      # (tl, b, V)

    cls_idx = jax.lax.broadcasted_iota(jnp.int32, logp.shape, 2)
    onehot = (cls_idx == labels[:, :, None]).astype(jnp.float32)
    nll = -jnp.sum(logp * onehot, axis=-1)              # (tl, b)
    smooth = -jnp.sum(logp, axis=-1) / float(V)         # (tl, b)

    valid = (labels != -1).astype(jnp.float32)
    per = ((1.0 - smoothing) * nll + smoothing * smooth) * valid

    tile_sum = jnp.sum(jnp.sum(per, axis=0, keepdims=True), axis=1, keepdims=True)
    tile_cnt = jnp.sum(jnp.sum(valid, axis=0, keepdims=True), axis=1, keepdims=True)
    sum_scr[...] += tile_sum
    cnt_scr[...] += tile_cnt

    loss_ref[...] = sum_scr[...] / jnp.maximum(cnt_scr[...], 1.0)


def _pick_l_tile(L):
    """L-tile for the fused classifier/loss kernel (8-aligned unless full)."""
    if L <= 8:
        return L, L
    tl = min(64, (min(L, 64) // 8) * 8)
    l_pad = ((L + tl - 1) // tl) * tl
    return tl, l_pad


# --------------------------------------------------------------------------
# Wrapper: parameter reshaping, embedding gather, mask, kernel calls.
# --------------------------------------------------------------------------
def speller_forward(params, encoder_states, target_sequence, target_labels,
                    input_lengths, label_smoothing_rate):
    B, T_enc, H = encoder_states.shape
    L = target_sequence.shape[1]
    E = params["emb_table"].shape[1]
    V = params["b_cls"].shape[0]
    H4 = 4 * H

    # -- glue: embedding lookup (teacher forcing), time-major (L, B, E) --
    emb_seq = params["emb_table"][target_sequence.T.astype(jnp.int32)]

    # -- glue: encoder padding mask (B, 1, T_enc) --
    mask = (jnp.arange(T_enc)[None, :] < input_lengths[:, None]).astype(jnp.float32)
    mask3 = mask[:, None, :]

    # -- glue: split / transpose weights; MXU operands in bf16 --
    w_ih_t = params["w_ih"].T                     # (E+H, 4H)
    w_ih_e = w_ih_t[:E].astype(jnp.bfloat16)      # (E, 4H)
    w_ih_c = w_ih_t[E:].astype(jnp.bfloat16)      # (H, 4H)
    w_hh_t = params["w_hh"].T.astype(jnp.bfloat16)
    b_lstm = (params["b_ih"] + params["b_hh"]).reshape(1, H4).astype(jnp.float32)
    w_cls_t = params["w_cls"].T                   # (2H, V)
    w_cls_h = w_cls_t[:H].astype(jnp.bfloat16)
    w_cls_c = w_cls_t[H:].astype(jnp.bfloat16)
    b_cls = params["b_cls"].reshape(1, V).astype(jnp.float32)
    enc_bf16 = encoder_states.astype(jnp.bfloat16)

    # ---- Kernel 1: hoisted input projection ----
    emb_flat = emb_seq.reshape(L * B, E).astype(jnp.bfloat16)
    gates_x_flat = pl.pallas_call(
        _input_proj_kernel,
        out_shape=jax.ShapeDtypeStruct((L * B, H4), jnp.float32),
        grid=(1,),
        in_specs=[pl.BlockSpec((L * B, E), lambda i: (0, 0)),
                  pl.BlockSpec((E, H4), lambda i: (0, 0)),
                  pl.BlockSpec((1, H4), lambda i: (0, 0))],
        out_specs=pl.BlockSpec((L * B, H4), lambda i: (0, 0)),
    )(emb_flat, w_ih_e, b_lstm)
    gates_x = gates_x_flat.reshape(L, B, H4)

    # ---- Kernel 2: sequential recurrence (single grid point) ----
    h_all, ctx_all, att_all = pl.pallas_call(
        _decoder_recurrence_kernel,
        out_shape=[jax.ShapeDtypeStruct((L, B, H), jnp.bfloat16),
                   jax.ShapeDtypeStruct((L, B, H), jnp.bfloat16),
                   jax.ShapeDtypeStruct((L, B, T_enc), jnp.float32)],
        grid=(1,),
        in_specs=[pl.BlockSpec((B, T_enc, H), lambda i: (0, 0, 0)),   # encoder
                  pl.BlockSpec((B, 1, T_enc), lambda i: (0, 0, 0)),   # mask
                  pl.BlockSpec((L, B, H4), lambda i: (0, 0, 0)),      # gates_x
                  pl.BlockSpec((H, H4), lambda i: (0, 0)),            # W_ih (ctx)
                  pl.BlockSpec((H, H4), lambda i: (0, 0))],           # W_hh
        out_specs=[pl.BlockSpec((L, B, H), lambda i: (0, 0, 0)),
                   pl.BlockSpec((L, B, H), lambda i: (0, 0, 0)),
                   pl.BlockSpec((L, B, T_enc), lambda i: (0, 0, 0))],
        compiler_params=pltpu.CompilerParams(
            dimension_semantics=("arbitrary",)),
    )(enc_bf16, mask3, gates_x, w_ih_c, w_hh_t)

    # ---- Kernel 3: fused classifier + CE loss, tiled over L ----
    TL, L_pad = _pick_l_tile(L)
    labels_lb = target_labels.T.astype(jnp.int32)        # (L, B)
    if L_pad != L:
        pad = L_pad - L
        h_all_p = jnp.pad(h_all, ((0, pad), (0, 0), (0, 0)))
        ctx_all_p = jnp.pad(ctx_all, ((0, pad), (0, 0), (0, 0)))
        labels_p = jnp.pad(labels_lb, ((0, pad), (0, 0)), constant_values=-1)
    else:
        h_all_p, ctx_all_p, labels_p = h_all, ctx_all, labels_lb
    n_tiles = L_pad // TL

    loss = pl.pallas_call(
        functools.partial(_cls_loss_kernel,
                          smoothing=float(label_smoothing_rate)),
        out_shape=jax.ShapeDtypeStruct((1, 1), jnp.float32),
        grid=(n_tiles,),
        in_specs=[pl.BlockSpec((TL, B, H), lambda i: (i, 0, 0)),
                  pl.BlockSpec((TL, B, H), lambda i: (i, 0, 0)),
                  pl.BlockSpec((TL, B), lambda i: (i, 0)),
                  pl.BlockSpec((H, V), lambda i: (0, 0)),
                  pl.BlockSpec((H, V), lambda i: (0, 0)),
                  pl.BlockSpec((1, V), lambda i: (0, 0))],
        out_specs=pl.BlockSpec((1, 1), lambda i: (0, 0)),
        scratch_shapes=[pltpu.VMEM((1, 1), jnp.float32),   # loss sum
                        pltpu.VMEM((1, 1), jnp.float32)],  # valid count
        compiler_params=pltpu.CompilerParams(
            dimension_semantics=("arbitrary",)),
    )(h_all_p, ctx_all_p, labels_p, w_cls_h, w_cls_c, b_cls)

    # match PyTorch return layout: attention weights (B, L, T_enc)
    return loss[0, 0], jnp.transpose(att_all, (1, 0, 2))


def init_params(key, vocab_size, embedding_dim, hidden_size):
    ks = jax.random.split(key, 7)
    emb_table = 0.1 * jax.random.normal(ks[0], (vocab_size + 1, embedding_dim),
                                        jnp.float32)
    emb_table = emb_table.at[31].set(0.0)        # padding_idx = 31
    in_sz = embedding_dim + hidden_size
    params = {
        "emb_table": emb_table,
        "w_ih": 0.1 * jax.random.normal(ks[1], (4 * hidden_size, in_sz), jnp.float32),
        "w_hh": 0.1 * jax.random.normal(ks[2], (4 * hidden_size, hidden_size), jnp.float32),
        "b_ih": 0.1 * jax.random.normal(ks[3], (4 * hidden_size,), jnp.float32),
        "b_hh": 0.1 * jax.random.normal(ks[4], (4 * hidden_size,), jnp.float32),
        "w_cls": 0.1 * jax.random.normal(ks[5], (vocab_size, 2 * hidden_size), jnp.float32),
        "b_cls": 0.1 * jax.random.normal(ks[6], (vocab_size,), jnp.float32),
    }
    return params


if __name__ == "__main__":
    key = jax.random.PRNGKey(0)
    B, T_enc, H, E, V, L = 2, 16, 32, 32, 32, 8
    label_smoothing_rate = 0.1

    k_enc, k_seq, k_lab, k_par = jax.random.split(key, 4)
    params = init_params(k_par, V, E, H)

    encoder_states = jax.random.normal(k_enc, (B, T_enc, H), jnp.float32)
    target_sequence = jax.random.randint(k_seq, (B, L), 0, V + 1, jnp.int32)
    target_labels = jax.random.randint(k_lab, (B, L), 0, V, jnp.int32)
    # mark a few trailing positions as ignored (-1), like padded labels
    target_labels = target_labels.at[1, L - 2:].set(-1)
    input_lengths = jnp.array([T_enc, T_enc - 6], jnp.int32)

    loss, att_weights = speller_forward(
        params, encoder_states, target_sequence, target_labels,
        input_lengths, label_smoothing_rate)
    jax.block_until_ready((loss, att_weights))

    assert att_weights.shape == (B, L, T_enc)
    assert loss.shape == ()
    assert bool(jnp.isfinite(loss))
    print("KERNEL_OK")
</pallas_src>

<mosaic_0001>
module attributes {stable_mosaic.version = 11 : i64} {
  func.func @_input_proj_kernel(%arg0: i32, %arg1: memref<16x32xbf16, #tpu.memory_space<vmem>>, %arg2: memref<32x128xbf16, #tpu.memory_space<vmem>>, %arg3: memref<1x128xf32, #tpu.memory_space<vmem>>, %arg4: memref<16x128xf32, #tpu.memory_space<vmem>>) attributes {dimension_semantics = [#tpu.dimension_semantics<arbitrary>], iteration_bounds = array<i64: 1>, scalar_prefetch = 0 : i64, scratch_operands = 0 : i64, tpu.core_type = #tpu.core_type<tc>, window_params = [{pipeline_mode = #tpu.pipeline_mode<synchronous>, transform_indices = @transform_0, window_bounds = array<i64: 16, 32>}, {pipeline_mode = #tpu.pipeline_mode<synchronous>, transform_indices = @transform_1, window_bounds = array<i64: 32, 128>}, {pipeline_mode = #tpu.pipeline_mode<synchronous>, transform_indices = @transform_2, window_bounds = array<i64: 1, 128>}, {pipeline_mode = #tpu.pipeline_mode<synchronous>, transform_indices = @transform_3, window_bounds = array<i64: 16, 128>}]} {
    %c0 = arith.constant 0 : index
    %c0_0 = arith.constant 0 : index
    %0 = vector.load %arg1[%c0, %c0_0] : memref<16x32xbf16, #tpu.memory_space<vmem>>, vector<16x32xbf16>
    %c0_1 = arith.constant 0 : index
    %c0_2 = arith.constant 0 : index
    %1 = vector.load %arg2[%c0_1, %c0_2] : memref<32x128xbf16, #tpu.memory_space<vmem>>, vector<32x128xbf16>
    %cst = arith.constant dense<0.000000e+00> : vector<16x128xf32>
    %2 = tpu.matmul %0, %1, %cst {dimension_numbers = #tpu.dot_dimension_numbers<[1], [0], [0], [1], [0, 0, 1, 1], [], []>} : vector<16x32xbf16>, vector<32x128xbf16>, vector<16x128xf32> -> vector<16x128xf32>
    %c0_3 = arith.constant 0 : index
    %c0_4 = arith.constant 0 : index
    %3 = vector.load %arg3[%c0_3, %c0_4] : memref<1x128xf32, #tpu.memory_space<vmem>>, vector<1x128xf32>
    %4 = vector.broadcast %3 : vector<1x128xf32> to vector<16x128xf32>
    %5 = arith.addf %2, %4 : vector<16x128xf32>
    %c0_5 = arith.constant 0 : index
    %c0_6 = arith.constant 0 : index
    %6 = vector.load %arg4[%c0_5, %c0_6] : memref<16x128xf32, #tpu.memory_space<vmem>>, vector<16x128xf32>
    tpu.vector_store %arg4[%c0_5, %c0_6], %5 {strides = array<i32>} : memref<16x128xf32, #tpu.memory_space<vmem>>, vector<16x128xf32>,
    return
  }
  func.func @transform_0(%arg0: i32) -> (i32, i32) {
    %c0_i32 = arith.constant 0 : i32
    %c0_i32_0 = arith.constant 0 : i32
    %c0_i32_1 = arith.constant 0 : i32
    return %c0_i32, %c0_i32_0 : i32, i32
  }
  func.func @transform_1(%arg0: i32) -> (i32, i32) {
    %c0_i32 = arith.constant 0 : i32
    %c0_i32_0 = arith.constant 0 : i32
    %c0_i32_1 = arith.constant 0 : i32
    return %c0_i32, %c0_i32_0 : i32, i32
  }
  func.func @transform_2(%arg0: i32) -> (i32, i32) {
    %c0_i32 = arith.constant 0 : i32
    %c0_i32_0 = arith.constant 0 : i32
    %c0_i32_1 = arith.constant 0 : i32
    return %c0_i32, %c0_i32_0 : i32, i32
  }
  func.func @transform_3(%arg0: i32) -> (i32, i32) {
    %c0_i32 = arith.constant 0 : i32
    %c0_i32_0 = arith.constant 0 : i32
    %c0_i32_1 = arith.constant 0 : i32
    return %c0_i32, %c0_i32_0 : i32, i32
  }
}

</mosaic_0001>

<llo_original>
// kernel: tpu_custom_call.1
$region0: #{tpu_custom_call.1}
  #allocation0 [shape = 'u32[]', space=smem, size = 0x4, offset = 0x4, fixed_abs, tag = 'smem constant byte address 0x4 - core index']
  #allocation1 [shape = 'u32[144,128]{1,0:T(1,128)}', space=vmem, size = 0x12000, scoped, tag = 'internal scratch']
  %s0 = inlined_call_operand.hbm [shape: bf16[16,32], index: 0, kind: input, shape index: {}]
  %s1 = inlined_call_operand.hbm [shape: bf16[32,128], index: 1, kind: input, shape index: {}]
  %s2 = inlined_call_operand.vmem [shape: f32[1,128], index: 2, kind: input, shape index: {}]
  %s3 = inlined_call_operand.hbm [shape: f32[16,128], index: 3, kind: output, shape index: {}]
  %s4 = sld [smem:[#allocation0]]
  $region30: #{tpu_custom_call.1} parent=0
    _
  %s6 = ssub.s32 1, %s4
  %s7 = scalar_select 0, %s6, %s4
  $region1: #{tpu_custom_call.1} parent=0
    #allocation2 [shape = 'u8[4096]{0}', space=vmem, size = 0x1000, scoped, tag = 'input window, operand 0, single buffered']
    #allocation3 [shape = 's32[1]{0}', space=sflag, size = 0x4, scoped, tag = 'scoped memory for tpu_custom_call.1']
    #allocation4 [shape = 's32[1]{0}', space=sflag, size = 0x4, scoped, tag = 'scoped memory for tpu_custom_call.1']
    #allocation5 [shape = 'u8[8192]{0}', space=vmem, size = 0x2000, scoped, tag = 'input window, operand 1, single buffered']
    #allocation6 [shape = 's32[1]{0}', space=sflag, size = 0x4, scoped, tag = 'scoped memory for tpu_custom_call.1']
    #allocation7 [shape = 'u8[8192]{0}', space=vmem, size = 0x2000, scoped, tag = 'output window, operand 0, single buffered']
    %8 = vsyncpa [#allocation3], 0
    %9 = vsyncpa [#allocation6], 0
    %10 = vsyncpa [#allocation4], 0
    // Predicated region
    $region2: #{tpu_custom_call.1} parent=1 // pred_check
      _
    $region3: #{tpu_custom_call.1} parent=1 // pred_check_branch
      %12 = sbr.rel (0) target = $region5
    $region4: #{tpu_custom_call.1} parent=1 // pred_region
      %s14 = ssub.s32 128, 128
      %15 = vsyncadd [#allocation3], %s14
      %s16 = sshll.u32 [#allocation2], 4
      %s17 = int_to_ptr.vmem [resolvable:$true] %s16
      %22 = dma.hbm_to_vmem [thread:$0]  %s0, 128, %s17, [#allocation3], 64, 64, 4
    $region5: #{tpu_custom_call.1} parent=1 // pred_fallthru
      _
    // Predicated region
    $region6: #{tpu_custom_call.1} parent=1 // pred_check
      _
    $region7: #{tpu_custom_call.1} parent=1 // pred_check_branch
      %24 = sbr.rel (0) target = $region9
    $region8: #{tpu_custom_call.1} parent=1 // pred_region
      %s26 = ssub.s32 256, 256
      %27 = vsyncadd [#allocation6], %s26
      %s28 = sshll.u32 [#allocation5], 4
      %s29 = int_to_ptr.vmem [resolvable:$true] %s28
      %34 = dma.hbm_to_vmem [thread:$0]  %s1, 256, %s29, [#allocation6], 64, 64, 4
    $region9: #{tpu_custom_call.1} parent=1 // pred_fallthru
      _
    // Predicated region
    $region10: #{tpu_custom_call.1} parent=1 // pred_check
      _
    $region11: #{tpu_custom_call.1} parent=1 // pred_check_branch
      %36 = sbr.rel (0) target = $region13
    $region12: #{tpu_custom_call.1} parent=1 // pred_region
      _
    $region13: #{tpu_custom_call.1} parent=1 // pred_fallthru
      _
    // Predicated region
    $region14: #{tpu_custom_call.1} parent=1 // pred_check
      _
    $region15: #{tpu_custom_call.1} parent=1 // pred_check_branch
      %38 = sbr.rel (0) target = $region17
    $region16: #{tpu_custom_call.1} parent=1 // pred_region
      %39 = dma.done [#allocation3], 128
    $region17: #{tpu_custom_call.1} parent=1 // pred_fallthru
      _
    // Predicated region
    $region18: #{tpu_custom_call.1} parent=1 // pred_check
      _
    $region19: #{tpu_custom_call.1} parent=1 // pred_check_branch
      %41 = sbr.rel (0) target = $region21
    $region20: #{tpu_custom_call.1} parent=1 // pred_region
      %42 = dma.done [#allocation6], 256
    $region21: #{tpu_custom_call.1} parent=1 // pred_fallthru
      _
    %v44 = vld [vmem:[#allocation2] sm:$0xf]
    %v45 = vld [vmem:[#allocation2 + $0x4] sm:$0xf]
    %v46 = vld [vmem:[#allocation5] sm:$0xf]
    %v47 = vld [vmem:[#allocation5 + $0x4] sm:$0xf]
    %v48 = vld [vmem:[#allocation5 + $0x8] sm:$0xf]
    %v49 = vld [vmem:[#allocation5 + $0xc] sm:$0xf]
    %v50 = vld [vmem:[%s2] sm:$0x1]
    %v52 = vlaneseq
    %v53 = vshrl.u32 %v52, 7
    %v54 = vsub.s32 0, %v53
    %v55 = vrot.slane %v50, %v54
    %v59 = vunpack.c.l.b16 %v44
    %v60 = vunpack.c.l.b16 %v45
    %v61 = vpack.c.b16 %v60, %v59
    %v66 = vunpack.c.l.b16 %v46
    %v67 = vunpack.c.l.b16 %v47
    %v68 = vunpack.c.l.b16 %v48
    %v69 = vunpack.c.l.b16 %v49
    %v70 = vpack.c.b16 %v67, %v66
    %v71 = vpack.c.b16 %v69, %v68
    %vm74 = vcmask 261120
    %v76 = vsel %vm74, %v61, 0
    %78 = vmatprep.subr.bf16.mxu0 0
    %79 = vmatpush1.bf16.msra.mxu0 0
    %80 = vmatprep.subr.bf16.mxu0 0
    %81 = vmatpush1.bf16.msra.mxu0 0
    %82 = vmatprep.subr.bf16.mxu0 0
    %83 = vmatpush1.bf16.msra.mxu0 0
    %84 = vmatprep.subr.bf16.mxu0 0
    %85 = vmatpush1.bf16.msra.mxu0 0
    %86 = vmatprep.subr.bf16.mxu0 0
    %87 = vmatpush1.bf16.msra.mxu0 0
    %88 = vmatprep.subr.bf16.mxu0 0
    %89 = vmatpush1.bf16.msra.mxu0 0
    %90 = vmatprep.subr.bf16.mxu0 0
    %91 = vmatpush1.bf16.msra.mxu0 %v71
    %92 = vmatprep.subr.bf16.mxu0 0
    %93 = vmatpush1.bf16.msra.mxu0 %v70
    %94 = vmatprep.subr.bf16.mxu0 0
    %95 = vmatpush2.bf16.msra.mxu0 0
    %96 = vmatprep.subr.bf16.mxu0 0
    %97 = vmatpush2.bf16.msra.mxu0 0
    %98 = vmatprep.subr.bf16.mxu0 0
    %99 = vmatpush2.bf16.msra.mxu0 0
    %100 = vmatprep.subr.bf16.mxu0 0
    %101 = vmatpush2.bf16.msra.mxu0 0
    %102 = vmatprep.subr.bf16.mxu0 0
    %103 = vmatpush2.bf16.msra.mxu0 0
    %104 = vmatprep.subr.bf16.mxu0 0
    %105 = vmatpush2.bf16.msra.mxu0 0
    %106 = vmatprep.subr.bf16.mxu0 0
    %107 = vmatpush2.bf16.msra.mxu0 0
    %108 = vmatprep.subr.bf16.mxu0 0
    %109 = vmatpush2.bf16.msra.mxu0 0
    %110 = vmatprep.mubr.bf16.mxu0 0
    %111 = vmatmul.mubr.bf16.gmra.mxu0 %v76
    %v112 = vpop.f32.mrf.mxu0
    %v113 = vadd.f32 %v55, %v112
    %v114 = vpop.f32.mrf.mxu0
    %v115 = vpop.f32.mrf.mxu0
    %v116 = vadd.f32 %v55, %v115
    %v117 = vpop.f32.mrf.mxu0
    %118 = vdwg.mxu0
    %119 = vst [vmem:[#allocation7] sm:$0xff] %v113
    %120 = vst [vmem:[#allocation7 + $0x8] sm:$0xff] %v116
    // Predicated region
    $region22: #{tpu_custom_call.1} parent=1 // pred_check
      _
    $region23: #{tpu_custom_call.1} parent=1 // pred_check_branch
      %122 = sbr.rel (0) target = $region25
    $region24: #{tpu_custom_call.1} parent=1 // pred_region
      %s124 = ssub.s32 256, 256
      %125 = vsyncadd [#allocation4], %s124
      %s126 = sshll.u32 [#allocation7], 4
      %s127 = int_to_ptr.vmem [resolvable:$true] %s126
      %132 = dma.vmem_to_hbm [thread:$0]  %s127, 256, %s3, [#allocation4], 128, 128, 8
    $region25: #{tpu_custom_call.1} parent=1 // pred_fallthru
      _
    // Predicated region
    $region26: #{tpu_custom_call.1} parent=1 // pred_check
      _
    $region27: #{tpu_custom_call.1} parent=1 // pred_check_branch
      %134 = sbr.rel (0) target = $region29
    $region28: #{tpu_custom_call.1} parent=1 // pred_region
      %135 = dma.done [#allocation4], 256
    $region29: #{tpu_custom_call.1} parent=1 // pred_fallthru
      _
    %136 = vsyncpa [#allocation3], 1
    %137 = vsyncpa [#allocation6], 1
    %138 = vsyncpa [#allocation4], 1

</llo_original>
